<compile_context>
chip_gen: v5e
topology: v5e:2x2
jax: 0.10.0
libtpu: 0.0.40
codegen_flags: <defaults>
</compile_context>

<pallas_src>
import functools

import jax
import jax.numpy as jnp
from jax import lax
from jax.experimental import pallas as pl
from jax.experimental.pallas import tpu as pltpu


def _conv1x1(w, x, use_vpu):
    """(R, Cin) @ (Cin, TS) -> (R, TS) in f32.

    For tiny Cin the 128/256-wide MXU contraction is mostly padding, so use an
    unrolled VPU outer-product FMA (free VALU slots in a memory-bound kernel).
    """
    if use_vpu:
        cin = x.shape[0]
        wf = w.astype(jnp.float32)
        xf = x.astype(jnp.float32)
        acc = wf[:, 0:1] * xf[0:1, :]
        for c in range(1, cin):
            acc = acc + wf[:, c:c + 1] * xf[c:c + 1, :]
        return acc
    return jnp.dot(w, x, preferred_element_type=jnp.float32)


def _asum_kernel(x_ref, wa_ref, ba_ref, asum_ref, acc_ref, *,
                 ts, s_total, need_mask, use_vpu):
    # Phase 1: per-(batch, channel) spatial sums of sigmoid(wa @ x + ba).
    # grid = (B, n_tiles); spatial-tile axis is a reduction ("arbitrary").
    t = pl.program_id(1)

    @pl.when(t == 0)
    def _():
        acc_ref[...] = jnp.zeros_like(acc_ref)

    att = jax.nn.sigmoid(_conv1x1(wa_ref[...], x_ref[...], use_vpu) + ba_ref[...])
    if need_mask:
        lane = lax.broadcasted_iota(jnp.int32, att.shape, 1) + t * ts
        att = jnp.where(lane < s_total, att, 0.0)
    acc_ref[...] += jnp.sum(att, axis=1, keepdims=True)

    @pl.when(t == pl.num_programs(1) - 1)
    def _():
        asum_ref[...] = acc_ref[...]


def _attention_avg_kernel(x_ref, w_ref, b_ref, scale_ref, o_ref, *,
                          cout_pad, sum_all, use_vpu):
    # x_ref:     (Cin, TS)          one spatial tile of one batch element
    # w_ref:     (2*Cp, Cin)        fused [BN-folded forw_conv ; atten] weight
    # b_ref:     (2*Cp, 1)  f32     fused [BN shift ; atten bias]
    # scale_ref: (B,) f32 SMEM (sum_all) or (Cp, 1) f32 VMEM (per-channel)
    #            holding num / (asum + 1e-8), from the phase-1 kernel.
    # o_ref:     (Cp, TS)
    z = _conv1x1(w_ref[...], x_ref[...], use_vpu) + b_ref[...]
    a1 = z[:cout_pad, :]                      # BN-folded forw_conv output
    att = jax.nn.sigmoid(z[cout_pad:, :])     # attention gate
    if sum_all:
        scale = scale_ref[pl.program_id(0)]   # per-batch scalar from SMEM
    else:
        scale = scale_ref[...]                # (Cp, 1), lane-broadcast
    o_ref[...] = (a1 * att * scale).astype(o_ref.dtype)


def attention_avg_pallas(x_nchw, wf, bn_gamma, bn_beta, bn_mean, bn_var, wa, ba, *,
                         sum_all=True, bn_eps=1e-5, spatial_tile=None,
                         matmul_dtype=jnp.bfloat16, out_dtype=jnp.float32):
    """x_nchw: [B, Cin, H, W] f32.  wf/wa: [Cout, Cin].  Returns [B, Cout, H, W]."""
    B, Cin, H, W = x_nchw.shape
    Cout = wf.shape[0]
    S = H * W
    num = float(S)
    Cout_pad = -(-Cout // 8) * 8              # (8,128)-aligned a1/att split
    pad_c = Cout_pad - Cout
    md = jnp.float32 if matmul_dtype is None else matmul_dtype

    # ---- fold BatchNorm (eval) into forw_conv; fuse the two 1x1 convs; pad ----
    bn_scale = bn_gamma / jnp.sqrt(bn_var + bn_eps)
    bn_shift = bn_beta - bn_mean * bn_scale
    wf_folded = jnp.pad(wf * bn_scale[:, None], ((0, pad_c), (0, 0)))
    wa_pad = jnp.pad(wa, ((0, pad_c), (0, 0)))
    w_fused = jnp.concatenate([wf_folded, wa_pad], axis=0).astype(md)   # (2*Cp, Cin)
    b_fused = jnp.concatenate([jnp.pad(bn_shift, (0, pad_c)),
                               jnp.pad(ba, (0, pad_c))]
                              ).reshape(2 * Cout_pad, 1).astype(jnp.float32)
    wa_k = wa_pad.astype(md)
    ba_k = jnp.pad(ba, (0, pad_c)).reshape(Cout_pad, 1).astype(jnp.float32)

    # ---- NCHW -> [B, Cin, S]: pure reshape; cast ONCE, shared by both phases ----
    x = x_nchw.reshape(B, Cin, S).astype(md)

    # ---- spatial tile from a VMEM budget (v7x only has 64 MiB physical) -------
    in_b = jnp.dtype(md).itemsize
    out_b = jnp.dtype(out_dtype).itemsize
    per_lane = (2 * Cin * in_b            # x tile, double-buffered
                + 2 * Cout_pad * out_b    # output tile, double-buffered
                + 2 * Cout_pad * 4        # z intermediate (f32)
                + 2 * Cout_pad * 4)       # att / result temporaries (f32)
    vmem_budget = 36 * 2 ** 20            # conservative: fits v7x with headroom
    cap = max(128, min(8192, (vmem_budget // per_lane) // 128 * 128))
    if spatial_tile is None:
        ts = S if S <= cap else cap       # whole image per step when it fits
    else:
        ts = min(spatial_tile, S)
        if ts < S:
            assert ts % 128 == 0, "spatial_tile must be a multiple of 128"
    n_tiles = pl.cdiv(S, ts)
    use_vpu = Cin <= 32
    cparams = dict(vmem_limit_bytes=48 * 2 ** 20)
    # TODO(synk): on v7x, if profiling shows single-core execution, switch the
    # batch grid axis to pltpu.CORE_PARALLEL (or split B over a 2-core core_map).

    # ---- phase 1: attention normalizer (Pallas reduction, no HBM att map) -----
    asum = pl.pallas_call(
        functools.partial(_asum_kernel, ts=ts, s_total=S,
                          need_mask=(S % ts != 0), use_vpu=use_vpu),
        out_shape=jax.ShapeDtypeStruct((B, Cout_pad, 1), jnp.float32),
        grid_spec=pltpu.PrefetchScalarGridSpec(
            num_scalar_prefetch=0,
            grid=(B, n_tiles),
            in_specs=[
                pl.BlockSpec((None, Cin, ts), lambda b, t: (b, 0, t)),   # x tile
                pl.BlockSpec((Cout_pad, Cin), lambda b, t: (0, 0)),      # wa
                pl.BlockSpec((Cout_pad, 1), lambda b, t: (0, 0)),        # ba
            ],
            out_specs=pl.BlockSpec((None, Cout_pad, 1), lambda b, t: (b, 0, 0)),
            scratch_shapes=[pltpu.VMEM((Cout_pad, 1), jnp.float32)],
        ),
        compiler_params=pltpu.CompilerParams(
            dimension_semantics=("parallel", "arbitrary"), **cparams),
    )(x, wa_k, ba_k)

    if sum_all:
        # Total over valid channels + spatial, then epsilon (PyTorch order).
        scale = (num / (jnp.sum(asum[:, :Cout, 0], axis=1) + 1e-8)).astype(jnp.float32)
        scale_spec = pl.BlockSpec(memory_space=pltpu.MemorySpace.SMEM)     # (B,)
    else:
        scale = (num / (asum + 1e-8)).astype(jnp.float32)                  # (B, Cp, 1)
        scale_spec = pl.BlockSpec((None, Cout_pad, 1), lambda b, t: (b, 0, 0))

    # ---- phase 2: fused conv+BN / conv+sigmoid / normalize --------------------
    out = pl.pallas_call(
        functools.partial(_attention_avg_kernel, cout_pad=Cout_pad,
                          sum_all=sum_all, use_vpu=use_vpu),
        out_shape=jax.ShapeDtypeStruct((B, Cout_pad, S), out_dtype),
        grid_spec=pltpu.PrefetchScalarGridSpec(
            num_scalar_prefetch=0,
            grid=(B, n_tiles),
            in_specs=[
                pl.BlockSpec((None, Cin, ts), lambda b, t: (b, 0, t)),       # x tile
                pl.BlockSpec((2 * Cout_pad, Cin), lambda b, t: (0, 0)),      # fused W
                pl.BlockSpec((2 * Cout_pad, 1), lambda b, t: (0, 0)),        # fused b
                scale_spec,                                                  # normalizer
            ],
            out_specs=pl.BlockSpec((None, Cout_pad, ts), lambda b, t: (b, 0, t)),
        ),
        compiler_params=pltpu.CompilerParams(
            dimension_semantics=("parallel", "parallel"), **cparams),
    )(x, w_fused, b_fused, scale)

    if Cout_pad != Cout:
        out = out[:, :Cout, :]
    return out.reshape(B, Cout, H, W)


def attention_avg_ref(x_nchw, wf, bn_gamma, bn_beta, bn_mean, bn_var, wa, ba, *,
                      sum_all=True, bn_eps=1e-5):
    """Pure-JAX reference mirroring the PyTorch forward (NCHW, eval-mode BN)."""
    a1 = jnp.einsum('bchw,oc->bohw', x_nchw, wf)
    a1 = ((a1 - bn_mean[None, :, None, None])
          / jnp.sqrt(bn_var[None, :, None, None] + bn_eps)
          * bn_gamma[None, :, None, None] + bn_beta[None, :, None, None])
    att = jax.nn.sigmoid(jnp.einsum('bchw,oc->bohw', x_nchw, wa)
                         + ba[None, :, None, None])
    num = x_nchw.shape[2] * x_nchw.shape[3]
    dims = (1, 2, 3) if sum_all else (2, 3)
    asum = jnp.sum(att, axis=dims, keepdims=True) + 1e-8
    return a1 * att * num / asum


if __name__ == "__main__":
    B, Cin, Cout, H, W = 2, 4, 8, 16, 16
    key = jax.random.PRNGKey(0)
    kx, kwf, kwa, kba, kg, kb, km, kv, k2 = jax.random.split(key, 9)

    x = jax.random.normal(kx, (B, Cin, H, W), dtype=jnp.float32)
    wf = jax.random.normal(kwf, (Cout, Cin), dtype=jnp.float32) * (1.0 / Cin) ** 0.5
    wa = jax.random.normal(kwa, (Cout, Cin), dtype=jnp.float32) * (1.0 / Cin) ** 0.5
    ba = jax.random.normal(kba, (Cout,), dtype=jnp.float32) * 0.1
    bn_gamma = 1.0 + 0.1 * jax.random.normal(kg, (Cout,), dtype=jnp.float32)
    bn_beta = 0.1 * jax.random.normal(kb, (Cout,), dtype=jnp.float32)
    bn_mean = 0.1 * jax.random.normal(km, (Cout,), dtype=jnp.float32)
    bn_var = jnp.abs(1.0 + 0.1 * jax.random.normal(kv, (Cout,), dtype=jnp.float32))
    args = (wf, bn_gamma, bn_beta, bn_mean, bn_var, wa, ba)

    # 1) Default config: bf16 matmul inputs, auto tile (whole image), sum_all=True.
    out = jax.block_until_ready(attention_avg_pallas(x, *args, sum_all=True))
    ref = attention_avg_ref(x, *args, sum_all=True)
    assert out.shape == (B, Cout, H, W)
    assert jnp.allclose(out, ref, atol=3e-2, rtol=3e-2), "mismatch (bf16 default)"

    # 2) f32 matmul, explicit small tile (exercises the tiled path), sum_all=True.
    out = jax.block_until_ready(attention_avg_pallas(
        x, *args, sum_all=True, spatial_tile=128, matmul_dtype=jnp.float32))
    assert jnp.allclose(out, ref, atol=1e-4, rtol=1e-4), "mismatch (f32 tiled)"

    # 3) Per-channel normalizer (sum_all=False), f32.
    out = jax.block_until_ready(attention_avg_pallas(
        x, *args, sum_all=False, spatial_tile=128, matmul_dtype=jnp.float32))
    ref3 = attention_avg_ref(x, *args, sum_all=False)
    assert jnp.allclose(out, ref3, atol=1e-4, rtol=1e-4), "mismatch (sum_all=False)"

    # 4) Non-divisible S (12*25=300, ts=128 -> partial last tile) and Cout not a
    #    multiple of 8 (exercises channel padding + asum lane masking), f32.
    H2, W2, Cout2 = 12, 25, 6
    ks = jax.random.split(k2, 8)
    x2 = jax.random.normal(ks[0], (B, Cin, H2, W2), dtype=jnp.float32)
    wf2 = jax.random.normal(ks[1], (Cout2, Cin), dtype=jnp.float32) * 0.5
    wa2 = jax.random.normal(ks[2], (Cout2, Cin), dtype=jnp.float32) * 0.5
    ba2 = 0.1 * jax.random.normal(ks[3], (Cout2,), dtype=jnp.float32)
    g2 = 1.0 + 0.1 * jax.random.normal(ks[4], (Cout2,), dtype=jnp.float32)
    b2 = 0.1 * jax.random.normal(ks[5], (Cout2,), dtype=jnp.float32)
    m2 = 0.1 * jax.random.normal(ks[6], (Cout2,), dtype=jnp.float32)
    v2 = jnp.abs(1.0 + 0.1 * jax.random.normal(ks[7], (Cout2,), dtype=jnp.float32))
    args2 = (wf2, g2, b2, m2, v2, wa2, ba2)
    out4 = jax.block_until_ready(attention_avg_pallas(
        x2, *args2, sum_all=True, spatial_tile=128, matmul_dtype=jnp.float32))
    ref4 = attention_avg_ref(x2, *args2, sum_all=True)
    assert out4.shape == (B, Cout2, H2, W2)
    assert jnp.allclose(out4, ref4, atol=1e-4, rtol=1e-4), "mismatch (ragged S / padded Cout)"

    print("KERNEL_OK")
</pallas_src>

<mosaic_0001>
module attributes {stable_mosaic.version = 11 : i64} {
  func.func @_asum_kernel(%arg0: i32, %arg1: i32, %arg2: memref<1x4x256xbf16, #tpu.memory_space<vmem>>, %arg3: memref<8x4xbf16, #tpu.memory_space<vmem>>, %arg4: memref<8x1xf32, #tpu.memory_space<vmem>>, %arg5: memref<1x8x1xf32, #tpu.memory_space<vmem>>, %arg6: memref<8x1xf32, #tpu.memory_space<vmem>>) attributes {dimension_semantics = [#tpu.dimension_semantics<parallel>, #tpu.dimension_semantics<arbitrary>], iteration_bounds = array<i64: 2, 1>, scalar_prefetch = 0 : i64, scratch_operands = 1 : i64, tpu.core_type = #tpu.core_type<tc>, window_params = [{transform_indices = @transform_0, window_bounds = array<i64: 1, 4, 256>}, {pipeline_mode = #tpu.pipeline_mode<synchronous>, transform_indices = @transform_1, window_bounds = array<i64: 8, 4>}, {pipeline_mode = #tpu.pipeline_mode<synchronous>, transform_indices = @transform_2, window_bounds = array<i64: 8, 1>}, {transform_indices = @transform_3, window_bounds = array<i64: 1, 8, 1>}]} {
    %c0_i32 = arith.constant 0 : i32
    %0 = arith.cmpi eq, %arg1, %c0_i32 : i32
    %1 = arith.extui %0 : i1 to i32
    %c0_i32_0 = arith.constant 0 : i32
    %2 = arith.cmpi ne, %1, %c0_i32_0 : i32
    scf.if %2 {
      %cst_14 = arith.constant 0.000000e+00 : f32
      %47 = vector.broadcast %cst_14 : f32 to vector<8x1xf32>
      %c0_15 = arith.constant 0 : index
      %c0_16 = arith.constant 0 : index
      %48 = vector.load %arg6[%c0_15, %c0_16] : memref<8x1xf32, #tpu.memory_space<vmem>>, vector<8x1xf32>
      tpu.vector_store %arg6[%c0_15, %c0_16], %47 {strides = array<i32>} : memref<8x1xf32, #tpu.memory_space<vmem>>, vector<8x1xf32>,
    } else {
    }
    %c0 = arith.constant 0 : index
    %c0_1 = arith.constant 0 : index
    %3 = vector.load %arg3[%c0, %c0_1] : memref<8x4xbf16, #tpu.memory_space<vmem>>, vector<8x4xbf16>
    %c0_2 = arith.constant 0 : index
    %c0_3 = arith.constant 0 : index
    %c0_4 = arith.constant 0 : index
    %4 = vector.load %arg2[%c0_2, %c0_3, %c0_4] : memref<1x4x256xbf16, #tpu.memory_space<vmem>>, vector<1x4x256xbf16>
    %5 = vector.shape_cast %4 : vector<1x4x256xbf16> to vector<4x256xbf16>
    %6 = arith.extf %3 : vector<8x4xbf16> to vector<8x4xf32>
    %7 = arith.extf %5 : vector<4x256xbf16> to vector<4x256xf32>
    %8 = vector.extract_strided_slice %6 {offsets = [0, 0], sizes = [8, 1], strides = [1, 1]} : vector<8x4xf32> to vector<8x1xf32>
    %9 = vector.extract_strided_slice %7 {offsets = [0, 0], sizes = [1, 256], strides = [1, 1]} : vector<4x256xf32> to vector<1x256xf32>
    %10 = vector.broadcast %8 : vector<8x1xf32> to vector<8x256xf32>
    %11 = vector.broadcast %9 : vector<1x256xf32> to vector<8x256xf32>
    %12 = arith.mulf %10, %11 : vector<8x256xf32>
    %13 = vector.extract_strided_slice %6 {offsets = [0, 1], sizes = [8, 1], strides = [1, 1]} : vector<8x4xf32> to vector<8x1xf32>
    %14 = vector.extract_strided_slice %7 {offsets = [1, 0], sizes = [1, 256], strides = [1, 1]} : vector<4x256xf32> to vector<1x256xf32>
    %15 = vector.broadcast %13 : vector<8x1xf32> to vector<8x256xf32>
    %16 = vector.broadcast %14 : vector<1x256xf32> to vector<8x256xf32>
    %17 = arith.mulf %15, %16 : vector<8x256xf32>
    %18 = arith.addf %12, %17 : vector<8x256xf32>
    %19 = vector.extract_strided_slice %6 {offsets = [0, 2], sizes = [8, 1], strides = [1, 1]} : vector<8x4xf32> to vector<8x1xf32>
    %20 = vector.extract_strided_slice %7 {offsets = [2, 0], sizes = [1, 256], strides = [1, 1]} : vector<4x256xf32> to vector<1x256xf32>
    %21 = vector.broadcast %19 : vector<8x1xf32> to vector<8x256xf32>
    %22 = vector.broadcast %20 : vector<1x256xf32> to vector<8x256xf32>
    %23 = arith.mulf %21, %22 : vector<8x256xf32>
    %24 = arith.addf %18, %23 : vector<8x256xf32>
    %25 = vector.extract_strided_slice %6 {offsets = [0, 3], sizes = [8, 1], strides = [1, 1]} : vector<8x4xf32> to vector<8x1xf32>
    %26 = vector.extract_strided_slice %7 {offsets = [3, 0], sizes = [1, 256], strides = [1, 1]} : vector<4x256xf32> to vector<1x256xf32>
    %27 = vector.broadcast %25 : vector<8x1xf32> to vector<8x256xf32>
    %28 = vector.broadcast %26 : vector<1x256xf32> to vector<8x256xf32>
    %29 = arith.mulf %27, %28 : vector<8x256xf32>
    %30 = arith.addf %24, %29 : vector<8x256xf32>
    %c0_5 = arith.constant 0 : index
    %c0_6 = arith.constant 0 : index
    %31 = vector.load %arg4[%c0_5, %c0_6] : memref<8x1xf32, #tpu.memory_space<vmem>>, vector<8x1xf32>
    %32 = vector.broadcast %31 : vector<8x1xf32> to vector<8x256xf32>
    %33 = arith.addf %30, %32 : vector<8x256xf32>
    %34 = arith.negf %33 : vector<8x256xf32>
    %35 = math.exp %34 : vector<8x256xf32>
    %cst = arith.constant 1.000000e+00 : f32
    %36 = vector.broadcast %cst : f32 to vector<8x256xf32>
    %37 = arith.addf %36, %35 : vector<8x256xf32>
    %38 = arith.divf %36, %37 : vector<8x256xf32>
    %c0_7 = arith.constant 0 : index
    %c0_8 = arith.constant 0 : index
    %39 = vector.load %arg6[%c0_7, %c0_8] : memref<8x1xf32, #tpu.memory_space<vmem>>, vector<8x1xf32>
    %cst_9 = arith.constant dense<0.000000e+00> : vector<8xf32>
    %40 = vector.multi_reduction <add>, %38, %cst_9 [1] : vector<8x256xf32> to vector<8xf32>
    %41 = vector.shape_cast %40 : vector<8xf32> to vector<8x1xf32>
    %42 = arith.addf %39, %41 : vector<8x1xf32>
    %c0_10 = arith.constant 0 : index
    %c0_11 = arith.constant 0 : index
    %43 = vector.load %arg6[%c0_10, %c0_11] : memref<8x1xf32, #tpu.memory_space<vmem>>, vector<8x1xf32>
    tpu.vector_store %arg6[%c0_10, %c0_11], %42 {strides = array<i32>} : memref<8x1xf32, #tpu.memory_space<vmem>>, vector<8x1xf32>,
    %c0_i32_12 = arith.constant 0 : i32
    %44 = arith.cmpi eq, %arg1, %c0_i32_12 : i32
    %45 = arith.extui %44 : i1 to i32
    %c0_i32_13 = arith.constant 0 : i32
    %46 = arith.cmpi ne, %45, %c0_i32_13 : i32
    scf.if %46 {
      %c0_14 = arith.constant 0 : index
      %c0_15 = arith.constant 0 : index
      %47 = vector.load %arg6[%c0_14, %c0_15] : memref<8x1xf32, #tpu.memory_space<vmem>>, vector<8x1xf32>
      %c0_16 = arith.constant 0 : index
      %c0_17 = arith.constant 0 : index
      %c0_18 = arith.constant 0 : index
      %48 = vector.load %arg5[%c0_16, %c0_17, %c0_18] : memref<1x8x1xf32, #tpu.memory_space<vmem>>, vector<1x8x1xf32>
      %49 = vector.shape_cast %48 : vector<1x8x1xf32> to vector<8x1xf32>
      %50 = vector.shape_cast %47 : vector<8x1xf32> to vector<1x8x1xf32>
      tpu.vector_store %arg5[%c0_16, %c0_17, %c0_18], %50 {strides = array<i32>} : memref<1x8x1xf32, #tpu.memory_space<vmem>>, vector<1x8x1xf32>,
    } else {
    }
    return
  }
  func.func @transform_0(%arg0: i32, %arg1: i32) -> (i32, i32, i32) {
    %c0_i32 = arith.constant 0 : i32
    %c0_i32_0 = arith.constant 0 : i32
    return %arg0, %c0_i32, %arg1 : i32, i32, i32
  }
  func.func @transform_1(%arg0: i32, %arg1: i32) -> (i32, i32) {
    %c0_i32 = arith.constant 0 : i32
    %c0_i32_0 = arith.constant 0 : i32
    %c0_i32_1 = arith.constant 0 : i32
    return %c0_i32, %c0_i32_0 : i32, i32
  }
  func.func @transform_2(%arg0: i32, %arg1: i32) -> (i32, i32) {
    %c0_i32 = arith.constant 0 : i32
    %c0_i32_0 = arith.constant 0 : i32
    %c0_i32_1 = arith.constant 0 : i32
    return %c0_i32, %c0_i32_0 : i32, i32
  }
  func.func @transform_3(%arg0: i32, %arg1: i32) -> (i32, i32, i32) {
    %c0_i32 = arith.constant 0 : i32
    %c0_i32_0 = arith.constant 0 : i32
    %c0_i32_1 = arith.constant 0 : i32
    return %arg0, %c0_i32, %c0_i32_0 : i32, i32, i32
  }
}

</mosaic_0001>

<llo_original>
// kernel: tpu_custom_call.1
$region0: #{tpu_custom_call.1}
  #allocation0 [shape = 'u32[]', space=smem, size = 0x4, offset = 0x4, fixed_abs, tag = 'smem constant byte address 0x4 - core index']
  #allocation1 [shape = 'u32[72,128]{1,0:T(1,128)}', space=vmem, size = 0x9000, scoped, tag = 'internal scratch']
  #allocation2 [shape = 'f32[8,1]{1,0:T(8,128)}', space=vmem, size = 0x1000, scoped, tag = 'scratch operand']
  %s0 = inlined_call_operand.vmem [shape: bf16[2,4,256], index: 0, kind: input, shape index: {}]
  %s1 = inlined_call_operand.vmem [shape: bf16[8,4], index: 1, kind: input, shape index: {}]
  %s2 = inlined_call_operand.vmem [shape: f32[8,1], index: 2, kind: input, shape index: {}]
  %s3 = inlined_call_operand.vmem [shape: f32[2,8,1], index: 3, kind: output, shape index: {}]
  %s4 = sld [smem:[#allocation0]]
  $region53: #{tpu_custom_call.1} parent=0
    _
  %s6 = ssub.s32 1, %s4
  %s7 = scalar_select 0, %s6, %s4
  loop: start=0, step=1, limit=4
  $region2: #{tpu_custom_call.1} parent=0 // loop_pre_header
    _
  $region3: #{tpu_custom_call.1} parent=0 // loop_header
    %s9 = sphi 0, %s13
    %p10 = scmp.ge.s32.totalorder %s9, 4
    %s16 = sphi 0, %s28
    %s17 = sphi 0, %s24
    %s18 = sphi 0, %s16
    %s19 = sphi 0, %s17
    %s20 = sphi 0, %s18
    %s21 = sphi 0, %s19
    %s33 = sphi 0, %s35
    %s36 = sphi 0, %s33
    %s37 = sphi 0, %s36
    %s53 = sphi 0, %s37
    %s57 = sphi 0, %s57
    %s59 = sphi 0, %s57
    %s60 = sphi 0, %s59
    %s74 = sphi 0, %s60
    %s78 = sphi 0, %s78
    %s80 = sphi 0, %s78
    %s81 = sphi 0, %s80
    %s95 = sphi 0, %s81
    %s101 = sphi 0, %s103
    %s104 = sphi 0, %s101
    %s105 = sphi 0, %s104
    %s121 = sphi 0, %s105
  $region4: #{tpu_custom_call.1} parent=0 // loop_header_branch
    %12 = sbr.rel (%p10) target = $region8
  $region5: #{tpu_custom_call.1} parent=0 // loop_body
    %s14 = ssub.s32 %s9, 1
    %s15 = ssub.s32 %s9, 2
    %s22 = sadd.s32 1, %s17
    %p23 = scmp.ge.s32.totalorder %s22, 1
    %s24 = scalar_select %p23, 0, %s22
    %s25 = sadd.s32 1, %s16
    %s26 = scalar_select %p23, %s25, %s16
    %p27 = scmp.ge.s32.totalorder %s26, 2
    %s28 = scalar_select %p27, 0, %s26
    %s29 = ssub.s32 %s16, %s28
    %s30 = ssub.s32 %s17, %s24
    %s31 = sor.u32 %s29, %s30
    %p32 = scmp.eq.s32.totalorder %s31, 0
    %s34 = sadd.s32 %s33, 1
    %s35 = scalar_select %p32, %s33, %s34
    %p38 = pneg %p32
    %p39 = scmp.eq.s32.totalorder %s9, 1
    %p40 = por %p38, %p39
    %p41 = scmp.ne.s32.totalorder %s33, %s36
    %p42 = scmp.eq.s32.totalorder %s9, 0
    %p43 = por %p41, %p42
    %p44 = scmp.ne.s32.totalorder %s33, %s36
    %p45 = scmp.eq.s32.totalorder %s14, 1
    %p46 = por %p44, %p45
    %p47 = scmp.ne.s32.totalorder %s36, %s37
    %p48 = scmp.eq.s32.totalorder %s14, 0
    %p49 = por %p47, %p48
    %p50 = scmp.ne.s32.totalorder %s36, %s37
    %p51 = scmp.eq.s32.totalorder %s15, 1
    %p52 = por %p50, %p51
    %p54 = scmp.ne.s32.totalorder %s37, %s53
    %p55 = scmp.eq.s32.totalorder %s15, 0
    %p56 = por %p54, %p55
    %s58 = sadd.s32 %s57, 1
    %p61 = scmp.eq.s32.totalorder %s9, 1
    %p62 = scmp.ne.s32.totalorder %s57, %s59
    %p63 = scmp.eq.s32.totalorder %s9, 0
    %p64 = por %p62, %p63
    %p65 = scmp.ne.s32.totalorder %s57, %s59
    %p66 = scmp.eq.s32.totalorder %s14, 1
    %p67 = por %p65, %p66
    %p68 = scmp.ne.s32.totalorder %s59, %s60
    %p69 = scmp.eq.s32.totalorder %s14, 0
    %p70 = por %p68, %p69
    %p71 = scmp.ne.s32.totalorder %s59, %s60
    %p72 = scmp.eq.s32.totalorder %s15, 1
    %p73 = por %p71, %p72
    %p75 = scmp.ne.s32.totalorder %s60, %s74
    %p76 = scmp.eq.s32.totalorder %s15, 0
    %p77 = por %p75, %p76
    %s79 = sadd.s32 %s78, 1
    %p82 = scmp.eq.s32.totalorder %s9, 1
    %p83 = scmp.ne.s32.totalorder %s78, %s80
    %p84 = scmp.eq.s32.totalorder %s9, 0
    %p85 = por %p83, %p84
    %p86 = scmp.ne.s32.totalorder %s78, %s80
    %p87 = scmp.eq.s32.totalorder %s14, 1
    %p88 = por %p86, %p87
    %p89 = scmp.ne.s32.totalorder %s80, %s81
    %p90 = scmp.eq.s32.totalorder %s14, 0
    %p91 = por %p89, %p90
    %p92 = scmp.ne.s32.totalorder %s80, %s81
    %p93 = scmp.eq.s32.totalorder %s15, 1
    %p94 = por %p92, %p93
    %p96 = scmp.ne.s32.totalorder %s81, %s95
    %p97 = scmp.eq.s32.totalorder %s15, 0
    %p98 = por %p96, %p97
    %s99 = ssub.s32 %s16, %s28
    %p100 = scmp.eq.s32.totalorder %s99, 0
    %s102 = sadd.s32 %s101, 1
    %s103 = scalar_select %p100, %s101, %s102
    %p106 = pneg %p100
    %p107 = scmp.eq.s32.totalorder %s9, 1
    %p108 = por %p106, %p107
    %p109 = scmp.ne.s32.totalorder %s101, %s104
    %p110 = scmp.eq.s32.totalorder %s9, 0
    %p111 = por %p109, %p110
    %p112 = scmp.ne.s32.totalorder %s101, %s104
    %p113 = scmp.eq.s32.totalorder %s14, 1
    %p114 = por %p112, %p113
    %p115 = scmp.ne.s32.totalorder %s104, %s105
    %p116 = scmp.eq.s32.totalorder %s14, 0
    %p117 = por %p115, %p116
    %p118 = scmp.ne.s32.totalorder %s104, %s105
    %p119 = scmp.eq.s32.totalorder %s15, 1
    %p120 = por %p118, %p119
    %p122 = scmp.ne.s32.totalorder %s105, %s121
    %p123 = scmp.eq.s32.totalorder %s15, 0
    %p124 = por %p122, %p123
    %p125 = scmp.le.s32.totalorder 1, %s9
    %p126 = scmp.lt.s32.totalorder %s9, 3
    %p127 = pnand %p125, %p126
    %p128 = pneg %p127
    // Predicated region
    $region9: #{tpu_custom_call.1} parent=5 // pred_check
      _
    $region10: #{tpu_custom_call.1} parent=5 // pred_check_branch
      %130 = sbr.rel (%p127) target = $region12
    $region11: #{tpu_custom_call.1} parent=5 // pred_region
      %s131 = ssub.s32 %s9, 1
      // Predicated region
      $region13: #{tpu_custom_call.1} parent=11 // pred_check
        %p132 = pneg %p70
      $region14: #{tpu_custom_call.1} parent=11 // pred_check_branch
        %134 = sbr.rel (%p132) target = $region16
      $region15: #{tpu_custom_call.1} parent=11 // pred_region
        _
      $region16: #{tpu_custom_call.1} parent=11 // pred_fallthru
        _
      // Predicated region
      $region17: #{tpu_custom_call.1} parent=11 // pred_check
        %p135 = pneg %p91
      $region18: #{tpu_custom_call.1} parent=11 // pred_check_branch
        %137 = sbr.rel (%p135) target = $region20
      $region19: #{tpu_custom_call.1} parent=11 // pred_region
        _
      $region20: #{tpu_custom_call.1} parent=11 // pred_fallthru
        _
    $region12: #{tpu_custom_call.1} parent=5 // pred_fallthru
      _
    %p138 = scmp.lt.s32.totalorder %s9, 2
    // Predicated region
    $region21: #{tpu_custom_call.1} parent=5 // pred_check
      %p139 = pneg %p138
    $region22: #{tpu_custom_call.1} parent=5 // pred_check_branch
      %141 = sbr.rel (%p139) target = $region24
    $region23: #{tpu_custom_call.1} parent=5 // pred_region
      // Predicated region
      $region25: #{tpu_custom_call.1} parent=23 // pred_check
        %p142 = pneg %p43
      $region26: #{tpu_custom_call.1} parent=23 // pred_check_branch
        %144 = sbr.rel (%p142) target = $region28
      $region27: #{tpu_custom_call.1} parent=23 // pred_region
        %s145 = smul.u32 2, %s17
        %p146 = scmp.lt.s32.totalorder %s16, 1
        %s147 = scalar_select %p146, %s16, 1
        %p148 = scmp.lt.s32.totalorder %s145, 1
        %s149 = scalar_select %p148, %s145, 1
        %s150 = smul.addr %s147, 2
        %s151 = sadd.s32 %s149, %s150
        %s152 = smul.addr %s151, 2
        %s153 = scalar_lea.vmem %s0, %s152
        %s154 = smul.u32 2, %s17
      $region28: #{tpu_custom_call.1} parent=23 // pred_fallthru
        _
    $region24: #{tpu_custom_call.1} parent=5 // pred_fallthru
      _
    %p155 = scmp.le.s32.totalorder 1, %s9
    %p156 = scmp.lt.s32.totalorder %s9, 3
    %p157 = pnand %p155, %p156
    %p158 = pneg %p157
    // Predicated region
    $region29: #{tpu_custom_call.1} parent=5 // pred_check
      _
    $region30: #{tpu_custom_call.1} parent=5 // pred_check_branch
      %160 = sbr.rel (%p157) target = $region32
    $region31: #{tpu_custom_call.1} parent=5 // pred_region
      %s161 = ssub.s32 %s9, 1
      %s162 = smul.u32 2, %s19
      %p163 = scmp.lt.s32.totalorder %s18, 1
      %s164 = scalar_select %p163, %s18, 1
      %p165 = scmp.lt.s32.totalorder %s162, 1
      %s166 = scalar_select %p165, %s162, 1
      %s167 = smul.addr %s164, 2
      %s168 = sadd.s32 %s166, %s167
      %s169 = smul.addr %s168, 2
      %s170 = scalar_lea.vmem %s0, %s169
      %p171 = pneg %p49
      %p172 = pneg %p46
      %p173 = pneg %p70
      %p174 = pneg %p67
      %p175 = pneg %p91
      %p176 = pneg %p88
      %p177 = pneg %p117
      %p178 = pneg %p114
      %p179 = scmp.lt.s32.totalorder %s18, 1
      %s180 = scalar_select %p179, %s18, 1
      %s181 = smul.addr %s180, 8
      %s182 = scalar_lea.vmem %s3, %s181
      %s183 = smul.u32 2, %s19
      %p184 = scmp.lt.s32.totalorder %s18, 1
      %s185 = scalar_select %p184, %s18, 1
      %p186 = scmp.lt.s32.totalorder %s183, 1
      %s187 = scalar_select %p186, %s183, 1
      %s188 = smul.addr %s185, 2
      %s189 = sadd.s32 %s187, %s188
      %s190 = smul.addr %s189, 2
      %s191 = scalar_lea.vmem %s0, %s190
      %s192 = smul.u32 2, %s19
      %p193 = scmp.lt.s32.totalorder %s18, 1
      %s194 = scalar_select %p193, %s18, 1
      %s195 = smul.addr %s194, 8
      %s196 = scalar_lea.vmem %s3, %s195
      %p197 = scmp.eq.s32.totalorder %s19, 0
      // Predicated region
      $region33: #{tpu_custom_call.1} parent=31 // pred_check
        %p198 = pneg %p197
      $region34: #{tpu_custom_call.1} parent=31 // pred_check_branch
        %200 = sbr.rel (%p198) target = $region36
      $region35: #{tpu_custom_call.1} parent=31 // pred_region
        %vm201 = vcmask 7168
        %202 = vst.msk [vmem:[#allocation2] sm:$0xff] %vm201, 0.0
      $region36: #{tpu_custom_call.1} parent=31 // pred_fallthru
        _
      %v203 = vld [vmem:[%s1] sm:$0xf]
      %v204 = vld [vmem:[%s191] sm:$0xf]
      %v205 = vunpack.c.l.bf16 %v203
      %v206 = vunpack.c.l.bf16 %v204
      %208 = vset.pattern.permute.xlu0 0
      %209 = vperm.xlu0 %208, %v205
      %v210 = vpop.permute.xlu0 %209
      %v213 = vperm.slane %v206, 0
      %v214 = vperm.slane %v206, 4
      %v217 = vperm.slane %v213, 0
      %v218 = vperm.slane %v214, 0
      %v219 = vmul.f32 %v210, %v217
      %v220 = vmul.f32 %v210, %v218
      %221 = vset.pattern.permute.xlu0 1
      %222 = vperm.xlu0 %221, %v205
      %v223 = vpop.permute.xlu0 %222
      %v225 = vperm.slane %v206, 1
      %v226 = vperm.slane %v206, 5
      %v229 = vperm.slane %v225, 1
      %v230 = vperm.slane %v226, 1
      %v231 = vmul.f32 %v223, %v229
      %v232 = vmul.f32 %v223, %v230
      %v233 = vadd.f32 %v219, %v231
      %v234 = vadd.f32 %v220, %v232
      %235 = vset.pattern.permute.xlu0 2
      %236 = vperm.xlu0 %235, %v205
      %v237 = vpop.permute.xlu0 %236
      %v239 = vperm.slane %v206, 2
      %v240 = vperm.slane %v206, 6
      %v243 = vperm.slane %v239, 2
      %v244 = vperm.slane %v240, 2
      %v245 = vmul.f32 %v237, %v243
      %v246 = vmul.f32 %v237, %v244
      %v247 = vadd.f32 %v233, %v245
      %v248 = vadd.f32 %v234, %v246
      %249 = vset.pattern.permute.xlu0 3
      %250 = vperm.xlu0 %249, %v205
      %v251 = vpop.permute.xlu0 %250
      %v253 = vperm.slane %v206, 3
      %v254 = vperm.slane %v206, 7
      %v257 = vperm.slane %v253, 3
      %v258 = vperm.slane %v254, 3
      %v259 = vmul.f32 %v251, %v257
      %v260 = vmul.f32 %v251, %v258
      %v261 = vadd.f32 %v247, %v259
      %v262 = vadd.f32 %v248, %v260
      %v263 = vld [vmem:[%s2] sm:$0xff]
      %265 = vset.pattern.permute.xlu0 0
      %266 = vperm.xlu0 %265, %v263
      %v267 = vpop.permute.xlu0 %266
      %v269 = vadd.f32 %v261, %v267
      %v270 = vadd.f32 %v262, %v267
      %v271 = vxor.u32 %v269, 2147483648
      %v272 = vxor.u32 %v270, 2147483648
      %v273 = vmul.f32 %v271, 1.442695
      %v274 = vpow.pop %v273
      %v275 = vmul.f32 %v272, 1.442695
      %v276 = vpow.pop %v275
      %v277 = vadd.f32 %v274, 1.0
      %v278 = vadd.f32 %v276, 1.0
      %v279 = vrcp.pop %v277
      %v280 = vmul.f32 %v277, %v279
      %v281 = vsub.f32 1.0, %v280
      %v282 = vmul.f32 %v279, %v281
      %v283 = vadd.f32 %v279, %v282
      %vm284 = vweird.f32 %v277
      %vm285 = vweird.f32 %v279
      %vm286 = vmor %vm284, %vm285
      %v287 = vsel %vm286, %v279, %v283
      %v288 = vand.u32 2147483647, %v277
      %vm289 = vcmp.eq.f32.partialorder %v288, 8.507059e+37
      %v290 = vand.u32 %v277, 2147483648
      %v291 = vor.u32 1.1754944e-38, %v290
      %v292 = vsel %vm289, %v291, %v287
      %v293 = vmul.f32 1.0, %v292
      %v294 = vrcp.pop %v278
      %v295 = vmul.f32 %v278, %v294
      %v296 = vsub.f32 1.0, %v295
      %v297 = vmul.f32 %v294, %v296
      %v298 = vadd.f32 %v294, %v297
      %vm299 = vweird.f32 %v278
      %vm300 = vweird.f32 %v294
      %vm301 = vmor %vm299, %vm300
      %v302 = vsel %vm301, %v294, %v298
      %v303 = vand.u32 2147483647, %v278
      %vm304 = vcmp.eq.f32.partialorder %v303, 8.507059e+37
      %v305 = vand.u32 %v278, 2147483648
      %v306 = vor.u32 1.1754944e-38, %v305
      %v307 = vsel %vm304, %v306, %v302
      %v308 = vmul.f32 1.0, %v307
      %v309 = vld [vmem:[#allocation2] sm:$0xff]
      %v310 = vadd.f32 %v293, %v308
      %311 = vadd.xlane.f32.xlu0 %v310
      %v312 = vpop.xlane.xlu0 %311
      %v313 = vadd.f32 %v309, %v312
      %vm314 = vcmask 7168
      %315 = vst.msk [vmem:[#allocation2] sm:$0xff] %vm314, %v313
      // Predicated region
      $region37: #{tpu_custom_call.1} parent=31 // pred_check
        %p316 = pneg %p197
      $region38: #{tpu_custom_call.1} parent=31 // pred_check_branch
        %318 = sbr.rel (%p316) target = $region40
      $region39: #{tpu_custom_call.1} parent=31 // pred_region
        %v319 = vld [vmem:[#allocation2] sm:$0xff]
        %320 = vst.msk [vmem:[%s196] sm:$0xff] %vm314, %v319
      $region40: #{tpu_custom_call.1} parent=31 // pred_fallthru
        _
      %p321 = scmp.lt.s32.totalorder %s18, 1
      %s322 = scalar_select %p321, %s18, 1
      %s323 = smul.addr %s322, 8
      %s324 = scalar_lea.vmem %s3, %s323
      // Predicated region
      $region41: #{tpu_custom_call.1} parent=31 // pred_check
        %p325 = pneg %p114
      $region42: #{tpu_custom_call.1} parent=31 // pred_check_branch
        %327 = sbr.rel (%p325) target = $region44
      $region43: #{tpu_custom_call.1} parent=31 // pred_region
        _
      $region44: #{tpu_custom_call.1} parent=31 // pred_fallthru
        _
    $region32: #{tpu_custom_call.1} parent=5 // pred_fallthru
      _
    %p328 = scmp.le.s32.totalorder 2, %s9
    // Predicated region
    $region45: #{tpu_custom_call.1} parent=5 // pred_check
      %p329 = pneg %p328
    $region46: #{tpu_custom_call.1} parent=5 // pred_check_branch
      %331 = sbr.rel (%p329) target = $region48
    $region47: #{tpu_custom_call.1} parent=5 // pred_region
      %s332 = ssub.s32 %s9, 2
      // Predicated region
      $region49: #{tpu_custom_call.1} parent=47 // pred_check
        %p333 = pneg %p120
      $region50: #{tpu_custom_call.1} parent=47 // pred_check_branch
        %335 = sbr.rel (%p333) target = $region52
      $region51: #{tpu_custom_call.1} parent=47 // pred_region
        %p336 = scmp.lt.s32.totalorder %s20, 1
        %s337 = scalar_select %p336, %s20, 1
        %s338 = smul.addr %s337, 8
        %s339 = scalar_lea.vmem %s3, %s338
      $region52: #{tpu_custom_call.1} parent=47 // pred_fallthru
        _
    $region48: #{tpu_custom_call.1} parent=5 // pred_fallthru
      _
  $region6: #{tpu_custom_call.1} parent=0 // loop_footer
    %s13 = sadd.s32 1, %s9
  $region7: #{tpu_custom_call.1} parent=0 // loop_footer_branch
    %8 = sbr.rel target = $region3
  $region8: #{tpu_custom_call.1} parent=0 // loop_exit
    _

</llo_original>
